<compile_context>
chip_gen: v6e
topology: v6e:2x2x1
jax: 0.10.0
libtpu: 0.0.40
codegen_flags: <defaults>
</compile_context>

<pallas_src>
import jax
import jax.numpy as jnp
from jax.experimental import pallas as pl
from jax.experimental.pallas import tpu as pltpu


def _classifier_kernel(x_ref, w_ref, b_ref, t_ref, prob_ref, loss_ref):
    x = x_ref[...]                       # (TB, D)  bf16 (or f32)
    w = w_ref[...]                       # (1, D)   resident in VMEM
    b = b_ref[0, 0]                      # f32 scalar bias from SMEM
    t = t_ref[...].astype(jnp.float32)   # (1, TB)  lane-dense targets

    # Linear(classifier_dim, 1) with batch on lanes: contract D-vs-D on the
    # MXU; the result is already (1, TB) -- no transpose, f32 accumulation.
    z = jax.lax.dot_general(
        w, x,
        dimension_numbers=(((1,), (1,)), ((), ())),
        preferred_element_type=jnp.float32,
    ) + b                                # (1, TB)

    # Shared transcendental: e = exp(-|z|) feeds both sigmoid and the BCE log
    # term; the divide runs on the EUP slot.
    e = jnp.exp(-jnp.abs(z))
    inv = pl.reciprocal(1.0 + e, approx=True)
    probs = jnp.where(z >= 0.0, inv, e * inv)          # sigmoid(z), stable
    prob_ref[...] = probs.astype(prob_ref.dtype)

    # BCEWithLogitsLoss per element (numerically stable):
    #   l_i = max(z, 0) - z * t + log(1 + exp(-|z|))
    per = jnp.maximum(z, 0.0) - z * t + jnp.log1p(e)   # (1, TB)
    loss_ref[...] = per.astype(loss_ref.dtype)


def _round_up(n, m):
    return ((n + m - 1) // m) * m


def binary_classifier_forward(x, weight, bias, targets, *, block_b=8192,
                              compute_dtype=jnp.bfloat16):
    """x: (B, D), weight: (1, D), bias: (1,) or (1, 1), targets: (B, 1).

    Returns (probabilities (B, 1) f32, loss scalar f32)."""
    B, D = x.shape

    # Batch tile: batch maps onto the lane axis -> multiple of 128, capped by
    # the (padded) batch size.
    tb = min(_round_up(block_b, 128), _round_up(B, 128))
    num_tiles = pl.cdiv(B, tb)
    b_pad = num_tiles * tb

    # bf16 input stream (halves HBM traffic); f32 accumulation in-kernel.
    x_c = x.astype(compute_dtype)
    w_c = weight.reshape(1, D).astype(compute_dtype)
    bias_c = jnp.asarray(bias, jnp.float32).reshape(1, 1)
    # Lane-dense targets: (B, 1) -> (1, B).
    t_c = targets.reshape(1, B).astype(jnp.float32)

    if b_pad != B:
        x_c = jnp.pad(x_c, ((0, b_pad - B), (0, 0)))
        t_c = jnp.pad(t_c, ((0, 0), (0, b_pad - B)))

    # Raise the scoped-VMEM limit only if the double-buffered working set
    # would not fit v5e's 16 MiB default (v6e/v7x defaults are 32 MiB).
    x_tile_bytes = tb * D * x_c.dtype.itemsize
    lane_bytes = tb * 4                      # each (1, tb) f32 stream
    vmem_est = 2 * (x_tile_bytes + 3 * lane_bytes) + 2 * D * w_c.dtype.itemsize
    cp_kwargs = dict(dimension_semantics=("parallel",))
    if vmem_est > 12 * 1024 * 1024:
        cp_kwargs["vmem_limit_bytes"] = int(min(2 * vmem_est, 48 * 1024 * 1024))

    probs_pad, loss_rows = pl.pallas_call(
        _classifier_kernel,
        out_shape=(
            jax.ShapeDtypeStruct((1, b_pad), jnp.float32),   # probs, lane-dense
            jax.ShapeDtypeStruct((1, b_pad), jnp.float32),   # per-row BCE terms
        ),
        grid=(num_tiles,),
        in_specs=[
            pl.BlockSpec((tb, D), lambda i: (i, 0)),            # x: streamed
            pl.BlockSpec((1, D), lambda i: (0, 0)),             # weight: resident
            pl.BlockSpec(memory_space=pltpu.MemorySpace.SMEM),  # bias scalar
            pl.BlockSpec((1, tb), lambda i: (0, i)),            # targets
        ],
        out_specs=(
            pl.BlockSpec((1, tb), lambda i: (0, i)),            # probs
            pl.BlockSpec((1, tb), lambda i: (0, i)),            # per-row loss
        ),
        compiler_params=pltpu.CompilerParams(**cp_kwargs),
    )(x_c, w_c, bias_c, t_c)

    probs = probs_pad[0, :B].reshape(B, 1)
    # Padded rows carry garbage values; slice them off BEFORE the mean.
    loss = jnp.sum(loss_rows[0, :B]) / jnp.float32(B)
    return probs, loss


def _reference(x, weight, bias, targets):
    z = x.astype(jnp.float32) @ weight.T.astype(jnp.float32) + bias.reshape(1, 1)
    probs = jax.nn.sigmoid(z)
    per = jnp.maximum(z, 0.0) - z * targets + jnp.log1p(jnp.exp(-jnp.abs(z)))
    return probs, jnp.mean(per)


if __name__ == "__main__":
    # Small demo: batch=20 (pads to one 128-lane tile), classifier_dim=128.
    B, D = 20, 128

    key = jax.random.PRNGKey(0)
    kx, kw, kb, kt = jax.random.split(key, 4)

    x = jax.random.normal(kx, (B, D), dtype=jnp.float32)
    # nn.Linear-style init: U(-1/sqrt(D), 1/sqrt(D)).
    bound = 1.0 / jnp.sqrt(jnp.float32(D))
    weight = jax.random.uniform(kw, (1, D), jnp.float32, -bound, bound)
    bias = jax.random.uniform(kb, (1, 1), jnp.float32, -bound, bound)
    targets = jax.random.bernoulli(kt, 0.5, (B, 1)).astype(jnp.float32)

    probs, loss = binary_classifier_forward(x, weight, bias, targets)
    probs = jax.block_until_ready(probs)
    loss = jax.block_until_ready(loss)

    ref_probs, ref_loss = _reference(x, weight, bias, targets)
    assert probs.shape == (B, 1)
    assert bool(jnp.isfinite(loss))
    # bf16 input cast + approx reciprocal => ~1e-3-level deviations expected.
    assert jnp.allclose(probs, ref_probs, atol=2e-2, rtol=2e-2)
    assert jnp.allclose(loss, ref_loss, atol=2e-2, rtol=2e-2)

    print("KERNEL_OK")
</pallas_src>

<mosaic_0001>
module attributes {stable_mosaic.version = 11 : i64} {
  func.func @_classifier_kernel(%arg0: i32, %arg1: memref<128x128xbf16, #tpu.memory_space<vmem>>, %arg2: memref<1x128xbf16, #tpu.memory_space<vmem>>, %arg3: memref<1x1xf32, #tpu.memory_space<smem>>, %arg4: memref<1x128xf32, #tpu.memory_space<vmem>>, %arg5: memref<1x128xf32, #tpu.memory_space<vmem>>, %arg6: memref<1x128xf32, #tpu.memory_space<vmem>>) attributes {dimension_semantics = [#tpu.dimension_semantics<parallel>], iteration_bounds = array<i64: 1>, scalar_prefetch = 0 : i64, scratch_operands = 0 : i64, tpu.core_type = #tpu.core_type<tc>, window_params = [{transform_indices = @transform_0, window_bounds = array<i64: 128, 128>}, {pipeline_mode = #tpu.pipeline_mode<synchronous>, transform_indices = @transform_1, window_bounds = array<i64: 1, 128>}, {transform_indices = @transform_2, window_bounds = array<i64: 1, 1>}, {transform_indices = @transform_3, window_bounds = array<i64: 1, 128>}, {transform_indices = @transform_4, window_bounds = array<i64: 1, 128>}, {transform_indices = @transform_5, window_bounds = array<i64: 1, 128>}]} {
    %c0 = arith.constant 0 : index
    %c0_0 = arith.constant 0 : index
    %0 = vector.load %arg1[%c0, %c0_0] : memref<128x128xbf16, #tpu.memory_space<vmem>>, vector<128x128xbf16>
    %c0_1 = arith.constant 0 : index
    %c0_2 = arith.constant 0 : index
    %1 = vector.load %arg2[%c0_1, %c0_2] : memref<1x128xbf16, #tpu.memory_space<vmem>>, vector<1x128xbf16>
    %c0_3 = arith.constant 0 : index
    %c0_4 = arith.constant 0 : index
    %2 = memref.load %arg3[%c0_3, %c0_4] : memref<1x1xf32, #tpu.memory_space<smem>>
    %c0_5 = arith.constant 0 : index
    %c0_6 = arith.constant 0 : index
    %3 = vector.load %arg4[%c0_5, %c0_6] : memref<1x128xf32, #tpu.memory_space<vmem>>, vector<1x128xf32>
    %cst = arith.constant dense<0.000000e+00> : vector<1x128xf32>
    %4 = tpu.matmul %1, %0, %cst {dimension_numbers = #tpu.dot_dimension_numbers<[1], [1], [0], [0], [0, 0, 1, 0], [], []>} : vector<1x128xbf16>, vector<128x128xbf16>, vector<1x128xf32> -> vector<1x128xf32>
    %5 = vector.broadcast %2 : f32 to vector<1x128xf32>
    %6 = arith.addf %4, %5 : vector<1x128xf32>
    %7 = math.absf %6 : vector<1x128xf32>
    %cst_7 = arith.constant 0.000000e+00 : f32
    %8 = vector.broadcast %cst_7 : f32 to vector<1x128xf32>
    %9 = arith.subf %8, %7 : vector<1x128xf32>
    %10 = math.exp %9 : vector<1x128xf32>
    %cst_8 = arith.constant 1.000000e+00 : f32
    %11 = vector.broadcast %cst_8 : f32 to vector<1x128xf32>
    %12 = arith.addf %11, %10 : vector<1x128xf32>
    %13 = tpu.reciprocal %12 {approx = true} : vector<1x128xf32> -> vector<1x128xf32>
    %cst_9 = arith.constant 0.000000e+00 : f32
    %14 = vector.broadcast %cst_9 : f32 to vector<1x128xf32>
    %15 = arith.cmpf oge, %6, %14 : vector<1x128xf32>
    %16 = arith.mulf %10, %13 : vector<1x128xf32>
    %17 = arith.select %15, %13, %16 : vector<1x128xi1>, vector<1x128xf32>
    %c0_10 = arith.constant 0 : index
    %c0_11 = arith.constant 0 : index
    %18 = vector.load %arg5[%c0_10, %c0_11] : memref<1x128xf32, #tpu.memory_space<vmem>>, vector<1x128xf32>
    tpu.vector_store %arg5[%c0_10, %c0_11], %17 {strides = array<i32>} : memref<1x128xf32, #tpu.memory_space<vmem>>, vector<1x128xf32>,
    %cst_12 = arith.constant 0.000000e+00 : f32
    %19 = vector.broadcast %cst_12 : f32 to vector<1x128xf32>
    %20 = arith.maximumf %6, %19 : vector<1x128xf32>
    %21 = arith.mulf %6, %3 : vector<1x128xf32>
    %22 = arith.subf %20, %21 : vector<1x128xf32>
    %23 = math.log1p %10 : vector<1x128xf32>
    %24 = arith.addf %22, %23 : vector<1x128xf32>
    %c0_13 = arith.constant 0 : index
    %c0_14 = arith.constant 0 : index
    %25 = vector.load %arg6[%c0_13, %c0_14] : memref<1x128xf32, #tpu.memory_space<vmem>>, vector<1x128xf32>
    tpu.vector_store %arg6[%c0_13, %c0_14], %24 {strides = array<i32>} : memref<1x128xf32, #tpu.memory_space<vmem>>, vector<1x128xf32>,
    return
  }
  func.func @transform_0(%arg0: i32) -> (i32, i32) {
    %c0_i32 = arith.constant 0 : i32
    %c0_i32_0 = arith.constant 0 : i32
    return %arg0, %c0_i32 : i32, i32
  }
  func.func @transform_1(%arg0: i32) -> (i32, i32) {
    %c0_i32 = arith.constant 0 : i32
    %c0_i32_0 = arith.constant 0 : i32
    %c0_i32_1 = arith.constant 0 : i32
    return %c0_i32, %c0_i32_0 : i32, i32
  }
  func.func @transform_2(%arg0: i32) -> (i32, i32) {
    %c0_i32 = arith.constant 0 : i32
    %c0_i32_0 = arith.constant 0 : i32
    %c0_i32_1 = arith.constant 0 : i32
    return %c0_i32, %c0_i32_0 : i32, i32
  }
  func.func @transform_3(%arg0: i32) -> (i32, i32) {
    %c0_i32 = arith.constant 0 : i32
    %c0_i32_0 = arith.constant 0 : i32
    return %c0_i32, %arg0 : i32, i32
  }
  func.func @transform_4(%arg0: i32) -> (i32, i32) {
    %c0_i32 = arith.constant 0 : i32
    %c0_i32_0 = arith.constant 0 : i32
    return %c0_i32, %arg0 : i32, i32
  }
  func.func @transform_5(%arg0: i32) -> (i32, i32) {
    %c0_i32 = arith.constant 0 : i32
    %c0_i32_0 = arith.constant 0 : i32
    return %c0_i32, %arg0 : i32, i32
  }
}

</mosaic_0001>

<llo_original>
// kernel: tpu_custom_call.1
$region0: #{tpu_custom_call.1}
  #allocation0 [shape = 'u32[]', space=smem, size = 0x4, offset = 0x4, fixed_abs, tag = 'smem constant byte address 0x4 - core index']
  #allocation1 [shape = 'u32[144,128]{1,0:T(1,128)}', space=vmem, size = 0x12000, scoped, tag = 'internal scratch']
  #allocation2 [shape = 'f32[1,1]{1,0:T(1,128)S(6)}', space=smem, size = 0x200, scoped, tag = 'scoped memory for tpu_custom_call.1']
  %s0 = inlined_call_operand.hbm [shape: bf16[128,128], index: 0, kind: input, shape index: {}]
  %s1 = inlined_call_operand.vmem [shape: bf16[1,128], index: 1, kind: input, shape index: {}]
  %s2 = inlined_call_operand.<no memory space> [shape: f32[1,1], index: 2, kind: input, shape index: {}]
  %s3 = inlined_call_operand.vmem [shape: f32[1,128], index: 3, kind: input, shape index: {}]
  %s4 = inlined_call_operand.hbm [shape: f32[1,128], index: 4, kind: output, shape index: {0}]
  %s5 = inlined_call_operand.hbm [shape: f32[1,128], index: 5, kind: output, shape index: {1}]
  %6 = xla_tuple %s4, %s5
  %s7 = sld [smem:[#allocation0]]
  $region38: #{tpu_custom_call.1} parent=0
    _
  %s9 = ssub.s32 1, %s7
  %s10 = scalar_select 0, %s9, %s7
  %11 = sst [smem:[#allocation2]] %s2
  $region1: #{tpu_custom_call.1} parent=0
    #allocation3 [shape = 'u8[32768]{0}', space=vmem, size = 0x8000, scoped, tag = 'input window, operand 0, single buffered']
    #allocation4 [shape = 's32[1]{0}', space=sflag, size = 0x4, scoped, tag = 'scoped memory for tpu_custom_call.1']
    #allocation5 [shape = 's32[1]{0}', space=sflag, size = 0x4, scoped, tag = 'scoped memory for tpu_custom_call.1']
    #allocation6 [shape = 'u8[512]{0}', space=vmem, size = 0x400, scoped, tag = 'output window, operand 0, single buffered']
    #allocation7 [shape = 'u8[512]{0}', space=vmem, size = 0x400, scoped, tag = 'output window, operand 1, single buffered']
    #allocation8 [shape = 's32[1]{0}', space=sflag, size = 0x4, scoped, tag = 'scoped memory for tpu_custom_call.1']
    %12 = vsyncpa [#allocation4], 0
    %13 = vsyncpa [#allocation5], 0
    %14 = vsyncpa [#allocation8], 0
    // Predicated region
    $region2: #{tpu_custom_call.1} parent=1 // pred_check
      _
    $region3: #{tpu_custom_call.1} parent=1 // pred_check_branch
      %16 = sbr.rel (0) target = $region5
    $region4: #{tpu_custom_call.1} parent=1 // pred_region
      %s18 = ssub.s32 1024, 1024
      %19 = vsyncadd [#allocation4], %s18
      %s20 = sshll.u32 [#allocation3], 4
      %s21 = int_to_ptr.vmem [resolvable:$true] %s20
      %26 = dma.hbm_to_vmem [thread:$0]  %s0, 1024, %s21, [#allocation4], 64, 64, 4
    $region5: #{tpu_custom_call.1} parent=1 // pred_fallthru
      _
    // Predicated region
    $region6: #{tpu_custom_call.1} parent=1 // pred_check
      _
    $region7: #{tpu_custom_call.1} parent=1 // pred_check_branch
      %28 = sbr.rel (0) target = $region9
    $region8: #{tpu_custom_call.1} parent=1 // pred_region
      _
    $region9: #{tpu_custom_call.1} parent=1 // pred_fallthru
      _
    // Predicated region
    $region10: #{tpu_custom_call.1} parent=1 // pred_check
      _
    $region11: #{tpu_custom_call.1} parent=1 // pred_check_branch
      %30 = sbr.rel (0) target = $region13
    $region12: #{tpu_custom_call.1} parent=1 // pred_region
      _
    $region13: #{tpu_custom_call.1} parent=1 // pred_fallthru
      _
    // Predicated region
    $region14: #{tpu_custom_call.1} parent=1 // pred_check
      _
    $region15: #{tpu_custom_call.1} parent=1 // pred_check_branch
      %32 = sbr.rel (0) target = $region17
    $region16: #{tpu_custom_call.1} parent=1 // pred_region
      _
    $region17: #{tpu_custom_call.1} parent=1 // pred_fallthru
      _
    // Predicated region
    $region18: #{tpu_custom_call.1} parent=1 // pred_check
      _
    $region19: #{tpu_custom_call.1} parent=1 // pred_check_branch
      %34 = sbr.rel (0) target = $region21
    $region20: #{tpu_custom_call.1} parent=1 // pred_region
      %35 = dma.done [#allocation4], 1024
    $region21: #{tpu_custom_call.1} parent=1 // pred_fallthru
      _
    %v37 = vld [vmem:[#allocation3] sm:$0xf]
    %v38 = vld [vmem:[#allocation3 + $0x4] sm:$0xf]
    %v39 = vld [vmem:[#allocation3 + $0x8] sm:$0xf]
    %v40 = vld [vmem:[#allocation3 + $0xc] sm:$0xf]
    %v41 = vld [vmem:[#allocation3 + $0x10] sm:$0xf]
    %v42 = vld [vmem:[#allocation3 + $0x14] sm:$0xf]
    %v43 = vld [vmem:[#allocation3 + $0x18] sm:$0xf]
    %v44 = vld [vmem:[#allocation3 + $0x1c] sm:$0xf]
    %v45 = vld [vmem:[#allocation3 + $0x20] sm:$0xf]
    %v46 = vld [vmem:[#allocation3 + $0x24] sm:$0xf]
    %v47 = vld [vmem:[#allocation3 + $0x28] sm:$0xf]
    %v48 = vld [vmem:[#allocation3 + $0x2c] sm:$0xf]
    %v49 = vld [vmem:[#allocation3 + $0x30] sm:$0xf]
    %v50 = vld [vmem:[#allocation3 + $0x34] sm:$0xf]
    %v51 = vld [vmem:[#allocation3 + $0x38] sm:$0xf]
    %v52 = vld [vmem:[#allocation3 + $0x3c] sm:$0xf]
    %v53 = vld [vmem:[%s1] sm:$0x1]
    %s54 = sld [smem:[#allocation2]]
    %v55 = vld [vmem:[%s3] sm:$0x1]
    %v56 = vstv %s54
    %v73 = vunpack.c.l.b16 %v37
    %v74 = vunpack.c.l.b16 %v38
    %v75 = vunpack.c.l.b16 %v39
    %v76 = vunpack.c.l.b16 %v40
    %v77 = vunpack.c.l.b16 %v41
    %v78 = vunpack.c.l.b16 %v42
    %v79 = vunpack.c.l.b16 %v43
    %v80 = vunpack.c.l.b16 %v44
    %v81 = vunpack.c.l.b16 %v45
    %v82 = vunpack.c.l.b16 %v46
    %v83 = vunpack.c.l.b16 %v47
    %v84 = vunpack.c.l.b16 %v48
    %v85 = vunpack.c.l.b16 %v49
    %v86 = vunpack.c.l.b16 %v50
    %v87 = vunpack.c.l.b16 %v51
    %v88 = vunpack.c.l.b16 %v52
    %v89 = vpack.c.b16 %v74, %v73
    %v90 = vpack.c.b16 %v76, %v75
    %v91 = vpack.c.b16 %v78, %v77
    %v92 = vpack.c.b16 %v80, %v79
    %v93 = vpack.c.b16 %v82, %v81
    %v94 = vpack.c.b16 %v84, %v83
    %v95 = vpack.c.b16 %v86, %v85
    %v96 = vpack.c.b16 %v88, %v87
    %105 = vmatprep.subr.bf16.mxu0 0
    %106 = vmatpush1.bf16.xpose.msra.mxu0 %v96
    %107 = vmatprep.subr.bf16.mxu0 0
    %108 = vmatpush1.bf16.xpose.msra.mxu0 %v95
    %109 = vmatprep.subr.bf16.mxu0 0
    %110 = vmatpush1.bf16.xpose.msra.mxu0 %v94
    %111 = vmatprep.subr.bf16.mxu0 0
    %112 = vmatpush1.bf16.xpose.msra.mxu0 %v93
    %113 = vmatprep.subr.bf16.mxu0 0
    %114 = vmatpush1.bf16.xpose.msra.mxu0 %v92
    %115 = vmatprep.subr.bf16.mxu0 0
    %116 = vmatpush1.bf16.xpose.msra.mxu0 %v91
    %117 = vmatprep.subr.bf16.mxu0 0
    %118 = vmatpush1.bf16.xpose.msra.mxu0 %v90
    %119 = vmatprep.subr.bf16.mxu0 0
    %120 = vmatpush1.bf16.xpose.msra.mxu0 %v89
    %121 = vmatprep.subr.bf16.mxu0 0
    %122 = vmatpush2.bf16.xpose.msra.mxu0 0
    %123 = vmatprep.subr.bf16.mxu0 0
    %124 = vmatpush2.bf16.xpose.msra.mxu0 0
    %125 = vmatprep.subr.bf16.mxu0 0
    %126 = vmatpush2.bf16.xpose.msra.mxu0 0
    %127 = vmatprep.subr.bf16.mxu0 0
    %128 = vmatpush2.bf16.xpose.msra.mxu0 0
    %129 = vmatprep.subr.bf16.mxu0 0
    %130 = vmatpush2.bf16.xpose.msra.mxu0 0
    %131 = vmatprep.subr.bf16.mxu0 0
    %132 = vmatpush2.bf16.xpose.msra.mxu0 0
    %133 = vmatprep.subr.bf16.mxu0 0
    %134 = vmatpush2.bf16.xpose.msra.mxu0 0
    %135 = vmatprep.subr.bf16.mxu0 0
    %136 = vmatpush2.bf16.xpose.msra.mxu0 0
    %137 = vmatprep.mubr.bf16.mxu0 0
    %138 = vmatmul.mubr.bf16.gmra.mxu0 %v53
    %v139 = vpop.f32.mrf.mxu0
    %v140 = vadd.f32 %v56, %v139
    %v141 = vpop.f32.mrf.mxu0
    %v142 = vpop.f32.mrf.mxu0
    %v143 = vpop.f32.mrf.mxu0
    %144 = vdwg.mxu0
    %v145 = vand.u32 2147483647, %v140
    %v146 = vsub.f32 0.0, %v145
    %v147 = vmul.f32 %v146, 1.442695
    %v148 = vpow.pop %v147
    %v149 = vadd.f32 %v148, 1.0
    %v150 = vrcp.pop %v149
    %vm151 = vcmp.ge.f32.partialorder %v140, 0.0
    %v152 = vmul.f32 %v148, %v150
    %v153 = vsel %vm151, %v150, %v152
    %154 = vst [vmem:[#allocation6] sm:$0x1] %v153
    %v155 = vmax.f32 %v140, 0.0
    %v156 = vmul.f32 %v140, %v55
    %v157 = vsub.f32 %v155, %v156
    %v158 = vadd.f32 %v148, 1.0
    %v159 = vlog2.pop %v158
    %v160 = vmul.f32 %v159, 0.6931472
    %v161 = vmul.f32 -0.5, %v148
    %v162 = vadd.f32 %v161, 1.0
    %v163 = vmul.f32 %v162, %v148
    %v164 = vand.u32 2147483647, %v148
    %vm165 = vcmp.lt.f32.partialorder %v164, 0.0004427343
    %v166 = vsel %vm165, %v163, %v160
    %v167 = vadd.f32 %v157, %v166
    %168 = vst [vmem:[#allocation7] sm:$0x1] %v167
    // Predicated region
    $region22: #{tpu_custom_call.1} parent=1 // pred_check
      _
    $region23: #{tpu_custom_call.1} parent=1 // pred_check_branch
      %170 = sbr.rel (0) target = $region25
    $region24: #{tpu_custom_call.1} parent=1 // pred_region
      %s172 = ssub.s32 16, 16
      %173 = vsyncadd [#allocation5], %s172
      %s175 = sshll.u32 [#allocation6], 4
      %s176 = int_to_ptr.vmem [resolvable:$true] %s175
      %178 = dma.vmem_to_hbm [thread:$0]  %s176, 16, %s4, [#allocation5]
    $region25: #{tpu_custom_call.1} parent=1 // pred_fallthru
      _
    // Predicated region
    $region26: #{tpu_custom_call.1} parent=1 // pred_check
      _
    $region27: #{tpu_custom_call.1} parent=1 // pred_check_branch
      %180 = sbr.rel (0) target = $region29
    $region28: #{tpu_custom_call.1} parent=1 // pred_region
      %s182 = ssub.s32 16, 16
      %183 = vsyncadd [#allocation8], %s182
      %s185 = sshll.u32 [#allocation7], 4
      %s186 = int_to_ptr.vmem [resolvable:$true] %s185
      %188 = dma.vmem_to_hbm [thread:$0]  %s186, 16, %s5, [#allocation8]
    $region29: #{tpu_custom_call.1} parent=1 // pred_fallthru
      _
    // Predicated region
    $region30: #{tpu_custom_call.1} parent=1 // pred_check
      _
    $region31: #{tpu_custom_call.1} parent=1 // pred_check_branch
      %190 = sbr.rel (0) target = $region33
    $region32: #{tpu_custom_call.1} parent=1 // pred_region
      %191 = dma.done [#allocation5], 16
    $region33: #{tpu_custom_call.1} parent=1 // pred_fallthru
      _
    // Predicated region
    $region34: #{tpu_custom_call.1} parent=1 // pred_check
      _
    $region35: #{tpu_custom_call.1} parent=1 // pred_check_branch
      %193 = sbr.rel (0) target = $region37
    $region36: #{tpu_custom_call.1} parent=1 // pred_region
      %194 = dma.done [#allocation8], 16
    $region37: #{tpu_custom_call.1} parent=1 // pred_fallthru
      _
    %195 = vsyncpa [#allocation4], 1
    %196 = vsyncpa [#allocation5], 1
    %197 = vsyncpa [#allocation8], 1

</llo_original>
